<compile_context>
chip_gen: v7x
topology: tpu7x:2x2x1
jax: 0.10.0
libtpu: 0.0.40
codegen_flags: <defaults>
</compile_context>

<pallas_src>
import functools
import math

import jax
import jax.numpy as jnp
from jax.experimental import pallas as pl
from jax.experimental.pallas import tpu as pltpu


def _round_up(n, m):
    return ((n + m - 1) // m) * m


def _sublane(dtype):
    # packed-tile granularity of the second-to-last dim, per dtype width
    return {4: 8, 2: 16, 1: 32}.get(jnp.dtype(dtype).itemsize, 8)


# ---------------------------------------------------------------------------
# Kernels
# ---------------------------------------------------------------------------

def _trunk_linear_kernel_single_k(*refs, has_bias):
    """2-D grid (M, N): the whole contraction dim fits in a single K tile."""
    if has_bias:
        x_ref, w_ref, b_ref, o_ref = refs
    else:
        x_ref, w_ref, o_ref = refs
        b_ref = None
    y = jnp.dot(x_ref[...], w_ref[...], preferred_element_type=jnp.float32)
    if has_bias:
        y = y + b_ref[...]                      # bias kept in f32
    o_ref[...] = y.astype(o_ref.dtype)


def _trunk_linear_kernel_tiled_k(*refs, has_bias, use_scratch):
    """3-D grid (M, N, K): accumulate over K tiles.

    use_scratch=False (f32 output): accumulate directly into the resident o_ref
    tile (its block index is (i, j), independent of k) - no scratch, no copy.
    """
    if use_scratch:
        if has_bias:
            x_ref, w_ref, b_ref, o_ref, acc_ref = refs
        else:
            x_ref, w_ref, o_ref, acc_ref = refs
            b_ref = None
    else:
        if has_bias:
            x_ref, w_ref, b_ref, o_ref = refs
        else:
            x_ref, w_ref, o_ref = refs
            b_ref = None
        acc_ref = o_ref

    k = pl.program_id(2)

    @pl.when(k == 0)
    def _():
        acc_ref[...] = jnp.zeros_like(acc_ref)

    acc_ref[...] += jnp.dot(x_ref[...], w_ref[...],
                            preferred_element_type=jnp.float32)

    if has_bias or use_scratch:
        @pl.when(k == pl.num_programs(2) - 1)
        def _():
            y = acc_ref[...]
            if has_bias:
                y = y + b_ref[...]
            o_ref[...] = y.astype(o_ref.dtype)


# ---------------------------------------------------------------------------
# Tiling plan / parameter preparation (hoisted out of the per-call path)
# ---------------------------------------------------------------------------

def _kn_plan(H_in, H_out, tn, tk, k_single_max):
    """Choose K/N tiles as 128-multiples that divide the lane-aligned dims."""
    K_al = _round_up(H_in, 128)
    if K_al <= k_single_max:
        tk_eff, single_k = K_al, True
    else:
        tk_eff = max(128, (min(tk, K_al) // 128) * 128)
        while tk_eff > 128 and K_al % tk_eff != 0:
            tk_eff -= 128
        single_k = False
    K_pad = K_al

    N_al = _round_up(H_out, 128)
    tn_eff = max(128, (min(tn, N_al) // 128) * 128)
    if N_al % tn_eff != 0:
        tn_eff = 128                            # 128 always divides the lane-aligned N
    N_pad = N_al
    return tk_eff, K_pad, single_k, tn_eff, N_pad


def prepare_trunk_linear_params(weight, bias=None, *, compute_dtype=None,
                                tn=256, tk=1024, k_single_max=2048):
    """One-time weight/bias prep: transpose to K-major, pad to the tile grid, cast.

    Hoist this out of the training/inference loop; trunk_linear_prepared() then
    pays no per-call weight transpose / pad HBM traffic.
    """
    H_out, H_in = weight.shape
    cdt = jnp.dtype(compute_dtype) if compute_dtype is not None else jnp.dtype(weight.dtype)
    tk_eff, K_pad, single_k, tn_eff, N_pad = _kn_plan(H_in, H_out, tn, tk, k_single_max)

    w_t = jnp.transpose(weight).astype(cdt)                 # (H_in, H_out), K-major RHS
    if (K_pad, N_pad) != (H_in, H_out):
        w_t = jnp.pad(w_t, ((0, K_pad - H_in), (0, N_pad - H_out)))

    b_p = None
    if bias is not None:
        b_p = bias.reshape(1, H_out).astype(jnp.float32)    # bias stays f32 in-kernel
        if N_pad != H_out:
            b_p = jnp.pad(b_p, ((0, 0), (0, N_pad - H_out)))

    return {"w": w_t, "b": b_p, "H_in": H_in, "H_out": H_out,
            "compute_dtype": cdt, "tn": tn, "tk": tk, "k_single_max": k_single_max}


# ---------------------------------------------------------------------------
# Forward
# ---------------------------------------------------------------------------

def trunk_linear_prepared(x, params, *, tm=256, out_dtype=None, vmem_limit_bytes=None):
    """TrunkLinear forward with pre-prepared (K-major, padded, cast) weights."""
    if x.ndim < 3:
        x = x[None]
    n_inputs = x.shape[0]
    x0 = x[0]                                   # trunk input identical along axis 0
    H_in, H_out = params["H_in"], params["H_out"]
    assert x0.shape[-1] == H_in
    lead_shape = x0.shape[:-1]
    x2d = x0.reshape(-1, H_in)
    S = x2d.shape[0]

    cdt = params["compute_dtype"]
    out_dtype = jnp.dtype(out_dtype) if out_dtype is not None else x0.dtype
    has_bias = params["b"] is not None

    tk_eff, K_pad, single_k, tn_eff, N_pad = _kn_plan(
        H_in, H_out, params["tn"], params["tk"], params["k_single_max"])
    w_p = params["w"]
    assert w_p.shape == (K_pad, N_pad), "prepared weight does not match tiling plan"

    # dtype-aware sublane rounding for the M (second-to-last) dim
    sub = _sublane(cdt)
    S_al = _round_up(S, sub)
    tm_eff = _round_up(min(tm, S_al), sub)
    S_pad = _round_up(S, tm_eff)

    # v7x megacore: keep >= 2 blocks on the parallel axes when possible.
    m_blocks, n_blocks = S_pad // tm_eff, N_pad // tn_eff
    if m_blocks * n_blocks < 2:
        if N_pad // 128 >= 2:
            tn_eff = N_pad // 2 if (N_pad // 2) % 128 == 0 else 128
            n_blocks = N_pad // tn_eff
        elif tm_eff % (2 * sub) == 0:
            tm_eff //= 2
            m_blocks = S_pad // tm_eff

    # Only pad x when actually required (K alignment / M tiling).
    x_p = x2d.astype(cdt)
    if (S_pad, K_pad) != (S, H_in):
        # TODO(synk): handle the ragged last M block in-kernel instead of zero-padding S.
        x_p = jnp.pad(x_p, ((0, S_pad - S), (0, K_pad - H_in)))

    operands = [x_p, w_p]
    if single_k:
        grid = (m_blocks, n_blocks)
        in_specs = [
            pl.BlockSpec((tm_eff, K_pad), lambda i, j: (i, 0)),
            pl.BlockSpec((K_pad, tn_eff), lambda i, j: (0, j)),
        ]
        if has_bias:
            operands.append(params["b"])
            in_specs.append(pl.BlockSpec((1, tn_eff), lambda i, j: (0, j)))
        out_specs = pl.BlockSpec((tm_eff, tn_eff), lambda i, j: (i, j))
        scratch_shapes = []
        dim_sem = ("parallel", "parallel")
        kernel = functools.partial(_trunk_linear_kernel_single_k, has_bias=has_bias)
    else:
        k_blocks = K_pad // tk_eff
        grid = (m_blocks, n_blocks, k_blocks)
        in_specs = [
            pl.BlockSpec((tm_eff, tk_eff), lambda i, j, k: (i, k)),
            pl.BlockSpec((tk_eff, tn_eff), lambda i, j, k: (k, j)),
        ]
        if has_bias:
            operands.append(params["b"])
            in_specs.append(pl.BlockSpec((1, tn_eff), lambda i, j, k: (0, j)))
        out_specs = pl.BlockSpec((tm_eff, tn_eff), lambda i, j, k: (i, j))
        use_scratch = out_dtype != jnp.dtype(jnp.float32)
        scratch_shapes = ([pltpu.VMEM((tm_eff, tn_eff), jnp.float32)]
                          if use_scratch else [])
        dim_sem = ("parallel", "parallel", "arbitrary")
        kernel = functools.partial(_trunk_linear_kernel_tiled_k,
                                   has_bias=has_bias, use_scratch=use_scratch)

    cost = pl.CostEstimate(
        flops=2 * S_pad * K_pad * N_pad,
        transcendentals=0,
        bytes_accessed=(x_p.size * x_p.dtype.itemsize * n_blocks
                        + w_p.size * w_p.dtype.itemsize * m_blocks
                        + S_pad * N_pad * jnp.dtype(out_dtype).itemsize),
    )

    compiler_kwargs = dict(dimension_semantics=dim_sem)
    if vmem_limit_bytes is not None:
        compiler_kwargs["vmem_limit_bytes"] = vmem_limit_bytes

    out_p = pl.pallas_call(
        kernel,
        out_shape=jax.ShapeDtypeStruct((S_pad, N_pad), out_dtype),
        grid_spec=pltpu.PrefetchScalarGridSpec(
            num_scalar_prefetch=0,
            grid=grid,
            in_specs=in_specs,
            out_specs=out_specs,
            scratch_shapes=scratch_shapes,
        ),
        compiler_params=pltpu.CompilerParams(**compiler_kwargs),
        cost_estimate=cost,
    )(*operands)

    out_core = out_p[:S, :H_out].reshape(lead_shape + (H_out,))
    # torch `expand` is a broadcast view; broadcast_to is the JAX equivalent.
    return jnp.broadcast_to(out_core[None], (n_inputs,) + out_core.shape)


def trunk_linear(x, weight, bias=None, *, compute_dtype=None, tm=256, tn=256,
                 tk=1024, k_single_max=2048, out_dtype=None, vmem_limit_bytes=None):
    """One-shot TrunkLinear.forward (prepares weights inline; hoist
    prepare_trunk_linear_params() when calling repeatedly with the same weights)."""
    params = prepare_trunk_linear_params(weight, bias, compute_dtype=compute_dtype,
                                         tn=tn, tk=tk, k_single_max=k_single_max)
    return trunk_linear_prepared(x, params, tm=tm, out_dtype=out_dtype,
                                 vmem_limit_bytes=vmem_limit_bytes)


def init_trunk_linear_params(key, in_features, out_features, dtype=jnp.float32):
    """Deterministic init matching torch kaiming_uniform_(a=sqrt(5)) + bias init."""
    kw, kb = jax.random.split(key)
    bound = 1.0 / math.sqrt(in_features)
    weight = jax.random.uniform(kw, (out_features, in_features), dtype,
                                minval=-bound, maxval=bound)
    bias = jax.random.uniform(kb, (out_features,), dtype,
                              minval=-bound, maxval=bound)
    return weight, bias


if __name__ == "__main__":
    key = jax.random.PRNGKey(0)
    k1, k2, k3, k4, k5, k6 = jax.random.split(key, 6)

    # ---- test 1: f32, bias, tiny unaligned shapes -> single-K 2-D grid path ----
    B, S, H_in, H_out = 2, 16, 32, 64
    x_single = jax.random.normal(k1, (S, H_in), dtype=jnp.float32)
    x = jnp.broadcast_to(x_single[None], (B, S, H_in))      # identical along axis 0
    weight, bias = init_trunk_linear_params(k2, H_in, H_out)
    out = jax.block_until_ready(trunk_linear(x, weight, bias))
    ref = jnp.broadcast_to((x_single @ weight.T + bias[None])[None], (B, S, H_out))
    assert out.shape == (B, S, H_out)
    assert jnp.allclose(out, ref, atol=1e-2, rtol=1e-2)

    # ---- test 2: f32, no bias, forced K-tiling -> 3-D grid, accumulate into o_ref ----
    B2, S2, H_in2, H_out2 = 3, 40, 384, 96
    x2_single = jax.random.normal(k3, (S2, H_in2), dtype=jnp.float32)
    x2 = jnp.broadcast_to(x2_single[None], (B2, S2, H_in2))
    weight2, _ = init_trunk_linear_params(k4, H_in2, H_out2)
    out2 = jax.block_until_ready(
        trunk_linear(x2, weight2, None, tk=128, k_single_max=128))
    ref2 = jnp.broadcast_to((x2_single @ weight2.T)[None], (B2, S2, H_out2))
    assert out2.shape == (B2, S2, H_out2)
    assert jnp.allclose(out2, ref2, atol=1e-2, rtol=1e-2)

    # ---- test 3: bf16 compute, hoisted weight prep, K-tiled scratch path, bias ----
    B3, S3, H_in3, H_out3 = 2, 24, 200, 130
    x3_single = jax.random.normal(k5, (S3, H_in3), dtype=jnp.float32)
    weight3, bias3 = init_trunk_linear_params(k6, H_in3, H_out3)
    params3 = prepare_trunk_linear_params(weight3, bias3,
                                          compute_dtype=jnp.bfloat16,
                                          tk=128, k_single_max=64)
    x3 = jnp.broadcast_to(x3_single[None].astype(jnp.bfloat16), (B3, S3, H_in3))
    out3 = jax.block_until_ready(trunk_linear_prepared(x3, params3))
    ref3 = jnp.broadcast_to((x3_single @ weight3.T + bias3[None])[None],
                            (B3, S3, H_out3))
    assert out3.shape == (B3, S3, H_out3)
    assert jnp.allclose(out3.astype(jnp.float32), ref3, atol=7e-2, rtol=7e-2)

    print("KERNEL_OK")
</pallas_src>

<mosaic_0001>
module attributes {stable_mosaic.version = 11 : i64} {
  func.func @_trunk_linear_kernel_single_k(%arg0: i32, %arg1: i32, %arg2: memref<8x128xf32, #tpu.memory_space<vmem>>, %arg3: memref<128x128xf32, #tpu.memory_space<vmem>>, %arg4: memref<1x128xf32, #tpu.memory_space<vmem>>, %arg5: memref<8x128xf32, #tpu.memory_space<vmem>>) attributes {dimension_semantics = [#tpu.dimension_semantics<parallel>, #tpu.dimension_semantics<parallel>], iteration_bounds = array<i64: 2, 1>, scalar_prefetch = 0 : i64, scratch_operands = 0 : i64, tpu.core_type = #tpu.core_type<tc>, window_params = [{transform_indices = @transform_0, window_bounds = array<i64: 8, 128>}, {transform_indices = @transform_1, window_bounds = array<i64: 128, 128>}, {transform_indices = @transform_2, window_bounds = array<i64: 1, 128>}, {transform_indices = @transform_3, window_bounds = array<i64: 8, 128>}]} {
    %c0 = arith.constant 0 : index
    %c0_0 = arith.constant 0 : index
    %0 = vector.load %arg2[%c0, %c0_0] : memref<8x128xf32, #tpu.memory_space<vmem>>, vector<8x128xf32>
    %c0_1 = arith.constant 0 : index
    %c0_2 = arith.constant 0 : index
    %1 = vector.load %arg3[%c0_1, %c0_2] : memref<128x128xf32, #tpu.memory_space<vmem>>, vector<128x128xf32>
    %cst = arith.constant dense<0.000000e+00> : vector<8x128xf32>
    %2 = tpu.matmul %0, %1, %cst {dimension_numbers = #tpu.dot_dimension_numbers<[1], [0], [0], [1], [0, 0, 1, 1], [], []>} : vector<8x128xf32>, vector<128x128xf32>, vector<8x128xf32> -> vector<8x128xf32>
    %c0_3 = arith.constant 0 : index
    %c0_4 = arith.constant 0 : index
    %3 = vector.load %arg4[%c0_3, %c0_4] : memref<1x128xf32, #tpu.memory_space<vmem>>, vector<1x128xf32>
    %4 = vector.broadcast %3 : vector<1x128xf32> to vector<8x128xf32>
    %5 = arith.addf %2, %4 : vector<8x128xf32>
    %c0_5 = arith.constant 0 : index
    %c0_6 = arith.constant 0 : index
    %6 = vector.load %arg5[%c0_5, %c0_6] : memref<8x128xf32, #tpu.memory_space<vmem>>, vector<8x128xf32>
    tpu.vector_store %arg5[%c0_5, %c0_6], %5 {strides = array<i32>} : memref<8x128xf32, #tpu.memory_space<vmem>>, vector<8x128xf32>,
    return
  }
  func.func @transform_0(%arg0: i32, %arg1: i32) -> (i32, i32) {
    %c0_i32 = arith.constant 0 : i32
    %c0_i32_0 = arith.constant 0 : i32
    return %arg0, %c0_i32 : i32, i32
  }
  func.func @transform_1(%arg0: i32, %arg1: i32) -> (i32, i32) {
    %c0_i32 = arith.constant 0 : i32
    %c0_i32_0 = arith.constant 0 : i32
    return %c0_i32, %arg1 : i32, i32
  }
  func.func @transform_2(%arg0: i32, %arg1: i32) -> (i32, i32) {
    %c0_i32 = arith.constant 0 : i32
    %c0_i32_0 = arith.constant 0 : i32
    return %c0_i32, %arg1 : i32, i32
  }
  func.func @transform_3(%arg0: i32, %arg1: i32) -> (i32, i32) {
    %c0_i32 = arith.constant 0 : i32
    return %arg0, %arg1 : i32, i32
  }
}

</mosaic_0001>

<llo_original>
// kernel: tpu_custom_call.1
$region0: #{tpu_custom_call.1}
  #allocation0 [shape = 'u32[]', space=smem, size = 0x4, offset = 0x4, fixed_abs, tag = 'smem constant byte address 0x4 - core index']
  #allocation1 [shape = 'u32[144,128]{1,0:T(1,128)}', space=vmem, size = 0x12000, scoped, tag = 'internal scratch']
  %s0 = inlined_call_operand.hbm [shape: f32[16,128], index: 0, kind: input, shape index: {}]
  %s1 = inlined_call_operand.hbm [shape: f32[128,128], index: 1, kind: input, shape index: {}]
  %s2 = inlined_call_operand.vmem [shape: f32[1,128], index: 2, kind: input, shape index: {}]
  %s3 = inlined_call_operand.hbm [shape: f32[16,128], index: 3, kind: output, shape index: {}]
  %s4 = sld [smem:[#allocation0]]
  $region53: #{tpu_custom_call.1} parent=0
    _
  %s6 = ssub.s32 1, %s4
  %s7 = scalar_select 0, %s6, %s4
  $region1: #{tpu_custom_call.1} parent=0
    #allocation2 [shape = 'u8[8192]{0}', space=vmem, size = 0x2000, scoped, tag = 'input window, operand 0']
    #allocation3 [shape = 's32[2]{0}', space=sflag, size = 0x8, scoped, tag = 'scoped memory for tpu_custom_call.1']
    #allocation4 [shape = 's32[2]{0}', space=sflag, size = 0x8, scoped, tag = 'scoped memory for tpu_custom_call.1']
    #allocation5 [shape = 'u8[65536]{0}', space=vmem, size = 0x10000, scoped, tag = 'input window, operand 1, single buffered']
    #allocation6 [shape = 's32[1]{0}', space=sflag, size = 0x4, scoped, tag = 'scoped memory for tpu_custom_call.1']
    #allocation7 [shape = 'u8[8192]{0}', space=vmem, size = 0x2000, scoped, tag = 'output window, operand 0']
    %8 = vsyncpa [#allocation3], 0
    %s9 = scalar_lea.sflag [#allocation3], 1
    %10 = vsyncpa %s9, 0
    %11 = vsyncpa [#allocation6], 0
    %12 = vsyncpa [#allocation4], 0
    %s13 = scalar_lea.sflag [#allocation4], 1
    %14 = vsyncpa %s13, 0
    loop: start=0, step=1, limit=4
    $region2: #{tpu_custom_call.1} parent=1 // loop_pre_header
      _
    $region3: #{tpu_custom_call.1} parent=1 // loop_header
      %s16 = sphi 0, %s20
      %p17 = scmp.ge.s32.totalorder %s16, 4
      %s23 = sphi 0, %s35
      %s24 = sphi 0, %s31
      %s25 = sphi 0, %s23
      %s26 = sphi 0, %s24
      %s27 = sphi 0, %s25
      %s28 = sphi 0, %s26
      %s38 = sphi 0, %s40
      %s41 = sphi 0, %s38
      %s42 = sphi 0, %s41
      %s58 = sphi 0, %s42
      %s64 = sphi 0, %s66
      %s67 = sphi 0, %s64
      %s68 = sphi 0, %s67
      %s84 = sphi 0, %s68
      %s90 = sphi 0, %s92
      %s93 = sphi 0, %s90
      %s94 = sphi 0, %s93
      %s110 = sphi 0, %s94
      %s118 = sphi 0, %s120
      %s121 = sphi 0, %s118
      %s122 = sphi 0, %s121
      %s138 = sphi 0, %s122
    $region4: #{tpu_custom_call.1} parent=1 // loop_header_branch
      %19 = sbr.rel (%p17) target = $region8
    $region5: #{tpu_custom_call.1} parent=1 // loop_body
      %s21 = ssub.s32 %s16, 1
      %s22 = ssub.s32 %s16, 2
      %s29 = sadd.s32 1, %s24
      %p30 = scmp.ge.s32.totalorder %s29, 1
      %s31 = scalar_select %p30, 0, %s29
      %s32 = sadd.s32 1, %s23
      %s33 = scalar_select %p30, %s32, %s23
      %p34 = scmp.ge.s32.totalorder %s33, 2
      %s35 = scalar_select %p34, 0, %s33
      %s36 = ssub.s32 %s23, %s35
      %p37 = scmp.eq.s32.totalorder %s36, 0
      %s39 = sadd.s32 %s38, 1
      %s40 = scalar_select %p37, %s38, %s39
      %p43 = pneg %p37
      %p44 = scmp.eq.s32.totalorder %s16, 1
      %p45 = por %p43, %p44
      %p46 = scmp.ne.s32.totalorder %s38, %s41
      %p47 = scmp.eq.s32.totalorder %s16, 0
      %p48 = por %p46, %p47
      %p49 = scmp.ne.s32.totalorder %s38, %s41
      %p50 = scmp.eq.s32.totalorder %s21, 1
      %p51 = por %p49, %p50
      %p52 = scmp.ne.s32.totalorder %s41, %s42
      %p53 = scmp.eq.s32.totalorder %s21, 0
      %p54 = por %p52, %p53
      %p55 = scmp.ne.s32.totalorder %s41, %s42
      %p56 = scmp.eq.s32.totalorder %s22, 1
      %p57 = por %p55, %p56
      %p59 = scmp.ne.s32.totalorder %s42, %s58
      %p60 = scmp.eq.s32.totalorder %s22, 0
      %p61 = por %p59, %p60
      %s62 = ssub.s32 %s24, %s31
      %p63 = scmp.eq.s32.totalorder %s62, 0
      %s65 = sadd.s32 %s64, 1
      %s66 = scalar_select %p63, %s64, %s65
      %p69 = pneg %p63
      %p70 = scmp.eq.s32.totalorder %s16, 1
      %p71 = por %p69, %p70
      %p72 = scmp.ne.s32.totalorder %s64, %s67
      %p73 = scmp.eq.s32.totalorder %s16, 0
      %p74 = por %p72, %p73
      %p75 = scmp.ne.s32.totalorder %s64, %s67
      %p76 = scmp.eq.s32.totalorder %s21, 1
      %p77 = por %p75, %p76
      %p78 = scmp.ne.s32.totalorder %s67, %s68
      %p79 = scmp.eq.s32.totalorder %s21, 0
      %p80 = por %p78, %p79
      %p81 = scmp.ne.s32.totalorder %s67, %s68
      %p82 = scmp.eq.s32.totalorder %s22, 1
      %p83 = por %p81, %p82
      %p85 = scmp.ne.s32.totalorder %s68, %s84
      %p86 = scmp.eq.s32.totalorder %s22, 0
      %p87 = por %p85, %p86
      %s88 = ssub.s32 %s24, %s31
      %p89 = scmp.eq.s32.totalorder %s88, 0
      %s91 = sadd.s32 %s90, 1
      %s92 = scalar_select %p89, %s90, %s91
      %p95 = pneg %p89
      %p96 = scmp.eq.s32.totalorder %s16, 1
      %p97 = por %p95, %p96
      %p98 = scmp.ne.s32.totalorder %s90, %s93
      %p99 = scmp.eq.s32.totalorder %s16, 0
      %p100 = por %p98, %p99
      %p101 = scmp.ne.s32.totalorder %s90, %s93
      %p102 = scmp.eq.s32.totalorder %s21, 1
      %p103 = por %p101, %p102
      %p104 = scmp.ne.s32.totalorder %s93, %s94
      %p105 = scmp.eq.s32.totalorder %s21, 0
      %p106 = por %p104, %p105
      %p107 = scmp.ne.s32.totalorder %s93, %s94
      %p108 = scmp.eq.s32.totalorder %s22, 1
      %p109 = por %p107, %p108
      %p111 = scmp.ne.s32.totalorder %s94, %s110
      %p112 = scmp.eq.s32.totalorder %s22, 0
      %p113 = por %p111, %p112
      %s114 = ssub.s32 %s23, %s35
      %s115 = ssub.s32 %s24, %s31
      %s116 = sor.u32 %s114, %s115
      %p117 = scmp.eq.s32.totalorder %s116, 0
      %s119 = sadd.s32 %s118, 1
      %s120 = scalar_select %p117, %s118, %s119
      %p123 = pneg %p117
      %p124 = scmp.eq.s32.totalorder %s16, 1
      %p125 = por %p123, %p124
      %p126 = scmp.ne.s32.totalorder %s118, %s121
      %p127 = scmp.eq.s32.totalorder %s16, 0
      %p128 = por %p126, %p127
      %p129 = scmp.ne.s32.totalorder %s118, %s121
      %p130 = scmp.eq.s32.totalorder %s21, 1
      %p131 = por %p129, %p130
      %p132 = scmp.ne.s32.totalorder %s121, %s122
      %p133 = scmp.eq.s32.totalorder %s21, 0
      %p134 = por %p132, %p133
      %p135 = scmp.ne.s32.totalorder %s121, %s122
      %p136 = scmp.eq.s32.totalorder %s22, 1
      %p137 = por %p135, %p136
      %p139 = scmp.ne.s32.totalorder %s122, %s138
      %p140 = scmp.eq.s32.totalorder %s22, 0
      %p141 = por %p139, %p140
      %p142 = scmp.le.s32.totalorder 1, %s16
      %p143 = scmp.lt.s32.totalorder %s16, 3
      %p144 = pnand %p142, %p143
      %p145 = pneg %p144
      // Predicated region
      $region9: #{tpu_custom_call.1} parent=5 // pred_check
        _
      $region10: #{tpu_custom_call.1} parent=5 // pred_check_branch
        %147 = sbr.rel (%p144) target = $region12
      $region11: #{tpu_custom_call.1} parent=5 // pred_region
        %s148 = ssub.s32 %s16, 1
        // Predicated region
        $region13: #{tpu_custom_call.1} parent=11 // pred_check
          %p149 = pneg %p80
        $region14: #{tpu_custom_call.1} parent=11 // pred_check_branch
          %151 = sbr.rel (%p149) target = $region16
        $region15: #{tpu_custom_call.1} parent=11 // pred_region
          %s153 = ssub.s32 2048, 2048
          %154 = vsyncadd [#allocation6], %s153
          %s155 = smul.addr %s26, 128
          %s156 = scalar_lea.hbm %s1, %s155
          %s157 = sshll.u32 [#allocation5], 4
          %s158 = int_to_ptr.vmem [resolvable:$true] %s157
          %163 = dma.hbm_to_vmem [thread:$0]  %s156, 2048, %s158, [#allocation6], 128, 128, 8
        $region16: #{tpu_custom_call.1} parent=11 // pred_fallthru
          _
        // Predicated region
        $region17: #{tpu_custom_call.1} parent=11 // pred_check
          %p164 = pneg %p106
        $region18: #{tpu_custom_call.1} parent=11 // pred_check_branch
          %166 = sbr.rel (%p164) target = $region20
        $region19: #{tpu_custom_call.1} parent=11 // pred_region
          %p167 = scmp.lt.s32.totalorder %s26, 0
          %s168 = scalar_select %p167, %s26, 0
          %s169 = scalar_lea.vmem %s2, %s168
        $region20: #{tpu_custom_call.1} parent=11 // pred_fallthru
          _
      $region12: #{tpu_custom_call.1} parent=5 // pred_fallthru
        _
      %p170 = scmp.lt.s32.totalorder %s16, 2
      // Predicated region
      $region21: #{tpu_custom_call.1} parent=5 // pred_check
        %p171 = pneg %p170
      $region22: #{tpu_custom_call.1} parent=5 // pred_check_branch
        %173 = sbr.rel (%p171) target = $region24
      $region23: #{tpu_custom_call.1} parent=5 // pred_region
        // Predicated region
        $region25: #{tpu_custom_call.1} parent=23 // pred_check
          %p174 = pneg %p48
        $region26: #{tpu_custom_call.1} parent=23 // pred_check_branch
          %176 = sbr.rel (%p174) target = $region28
        $region27: #{tpu_custom_call.1} parent=23 // pred_region
          %s177 = sand.u32 %s38, 1
          %s178 = scalar_lea.sflag [#allocation3], %s177
          %s179 = sand.u32 %s38, 1
          %s180 = smul.addr %s179, 8
          %s181 = scalar_lea.vmem [#allocation2], %s180
          %s183 = ssub.s32 128, 128
          %184 = vsyncadd %s178, %s183
          %s185 = smul.addr %s23, 128
          %s186 = scalar_lea.hbm %s0, %s185
          %s188 = sshll.u32 %s181, 4
          %s189 = int_to_ptr.vmem [resolvable:$true] %s188
          %191 = dma.hbm_to_vmem [thread:$0]  %s186, 128, %s189, %s178
        $region28: #{tpu_custom_call.1} parent=23 // pred_fallthru
          _
      $region24: #{tpu_custom_call.1} parent=5 // pred_fallthru
        _
      %p192 = scmp.le.s32.totalorder 1, %s16
      %p193 = scmp.lt.s32.totalorder %s16, 3
      %p194 = pnand %p192, %p193
      %p195 = pneg %p194
      // Predicated region
      $region29: #{tpu_custom_call.1} parent=5 // pred_check
        _
      $region30: #{tpu_custom_call.1} parent=5 // pred_check_branch
        %197 = sbr.rel (%p194) target = $region32
      $region31: #{tpu_custom_call.1} parent=5 // pred_region
        %s198 = ssub.s32 %s16, 1
        %s199 = sand.u32 %s41, 1
        %s200 = scalar_lea.sflag [#allocation3], %s199
        %s201 = sand.u32 %s41, 1
        %s202 = smul.addr %s201, 8
        %s203 = scalar_lea.vmem [#allocation2], %s202
        // Predicated region
        $region33: #{tpu_custom_call.1} parent=31 // pred_check
          %p204 = pneg %p54
        $region34: #{tpu_custom_call.1} parent=31 // pred_check_branch
          %206 = sbr.rel (%p204) target = $region36
        $region35: #{tpu_custom_call.1} parent=31 // pred_region
          %207 = dma.done %s200, 128
        $region36: #{tpu_custom_call.1} parent=31 // pred_fallthru
          _
        // Predicated region
        $region37: #{tpu_custom_call.1} parent=31 // pred_check
          %p208 = pneg %p80
        $region38: #{tpu_custom_call.1} parent=31 // pred_check_branch
          %210 = sbr.rel (%p208) target = $region40
        $region39: #{tpu_custom_call.1} parent=31 // pred_region
          %211 = dma.done [#allocation6], 2048
        $region40: #{tpu_custom_call.1} parent=31 // pred_fallthru
          _
        %s212 = sand.u32 %s41, 1
        %s213 = scalar_lea.sflag [#allocation3], %s212
        %s214 = sand.u32 %s41, 1
        %s215 = smul.addr %s214, 8
        %s216 = scalar_lea.vmem [#allocation2], %s215
        %p217 = pneg %p54
        %p218 = pneg %p51
        %p219 = pneg %p80
        %p220 = pneg %p77
        %p221 = scmp.lt.s32.totalorder %s26, 0
        %s222 = scalar_select %p221, %s26, 0
        %s223 = scalar_lea.vmem %s2, %s222
        %p224 = pneg %p106
        %p225 = pneg %p103
        %p226 = pneg %p134
        %p227 = pneg %p131
        %s228 = sand.u32 %s121, 1
        %s229 = scalar_lea.sflag [#allocation4], %s228
        %s230 = sand.u32 %s121, 1
        %s231 = smul.addr %s230, 8
        %s232 = scalar_lea.vmem [#allocation7], %s231
        %p233 = scmp.lt.s32.totalorder %s26, 0
        %s234 = scalar_select %p233, %s26, 0
        %s235 = scalar_lea.vmem %s2, %s234
        %v236 = vld [vmem:[%s203] sm:$0xff]
        %v237 = vld [vmem:[#allocation5] sm:$0xff]
        %v238 = vld [vmem:[#allocation5 + $0x8] sm:$0xff]
        %v239 = vld [vmem:[#allocation5 + $0x10] sm:$0xff]
        %v240 = vld [vmem:[#allocation5 + $0x18] sm:$0xff]
        %v241 = vld [vmem:[#allocation5 + $0x20] sm:$0xff]
        %v242 = vld [vmem:[#allocation5 + $0x28] sm:$0xff]
        %v243 = vld [vmem:[#allocation5 + $0x30] sm:$0xff]
        %v244 = vld [vmem:[#allocation5 + $0x38] sm:$0xff]
        %v245 = vld [vmem:[#allocation5 + $0x40] sm:$0xff]
        %v246 = vld [vmem:[#allocation5 + $0x48] sm:$0xff]
        %v247 = vld [vmem:[#allocation5 + $0x50] sm:$0xff]
        %v248 = vld [vmem:[#allocation5 + $0x58] sm:$0xff]
        %v249 = vld [vmem:[#allocation5 + $0x60] sm:$0xff]
        %v250 = vld [vmem:[#allocation5 + $0x68] sm:$0xff]
        %v251 = vld [vmem:[#allocation5 + $0x70] sm:$0xff]
        %v252 = vld [vmem:[#allocation5 + $0x78] sm:$0xff]
        %v253 = vld [vmem:[%s235] sm:$0x1]
        %v255 = vlaneseq
        %v256 = vshrl.u32 %v255, 7
        %v257 = vsub.s32 0, %v256
        %v258 = vrot.slane %v253, %v257
        %260 = vmatprep.subr.mxu0 0.0
        %261 = vmatpush1.msra.mxu0 %v237
        %262 = vmatprep.subr.mxu0 0.0
        %263 = vmatpush1.msra.mxu0 %v238
        %264 = vmatprep.subr.mxu0 0.0
        %265 = vmatpush1.msra.mxu0 %v239
        %266 = vmatprep.subr.mxu0 0.0
        %267 = vmatpush1.msra.mxu0 %v240
        %268 = vmatprep.subr.mxu0 0.0
        %269 = vmatpush1.msra.mxu0 %v241
        %270 = vmatprep.subr.mxu0 0.0
        %271 = vmatpush1.msra.mxu0 %v242
        %272 = vmatprep.subr.mxu0 0.0
        %273 = vmatpush1.msra.mxu0 %v243
        %274 = vmatprep.subr.mxu0 0.0
        %275 = vmatpush1.msra.mxu0 %v244
        %276 = vmatprep.subr.mxu0 0.0
        %277 = vmatpush1.msra.mxu0 %v245
        %278 = vmatprep.subr.mxu0 0.0
        %279 = vmatpush1.msra.mxu0 %v246
        %280 = vmatprep.subr.mxu0 0.0
        %281 = vmatpush1.msra.mxu0 %v247
        %282 = vmatprep.subr.mxu0 0.0
        %283 = vmatpush1.msra.mxu0 %v248
        %284 = vmatprep.subr.mxu0 0.0
        %285 = vmatpush1.msra.mxu0 %v249
        %286 = vmatprep.subr.mxu0 0.0
        %287 = vmatpush1.msra.mxu0 %v250
        %288 = vmatprep.subr.mxu0 0.0
        %289 = vmatpush1.msra.mxu0 %v251
        %290 = vmatprep.subr.mxu0 0.0
        %291 = vmatpush1.msra.mxu0 %v252
        %292 = vmatprep.subr.mxu0 0.0
        %293 = vmatpush1.msra.mxu0 0.0
        %294 = vmatprep.subr.mxu0 0.0
        %295 = vmatpush1.msra.mxu0 0.0
        %296 = vmatprep.subr.mxu0 0.0
        %297 = vmatpush1.msra.mxu0 0.0
        %298 = vmatprep.subr.mxu0 0.0
        %299 = vmatpush1.msra.mxu0 0.0
        %300 = vmatprep.subr.mxu0 0.0
        %301 = vmatpush1.msra.mxu0 0.0
        %302 = vmatprep.subr.mxu0 0.0
        %303 = vmatpush1.msra.mxu0 0.0
        %304 = vmatprep.subr.mxu0 0.0
        %305 = vmatpush1.msra.mxu0 0.0
        %306 = vmatprep.subr.mxu0 0.0
        %307 = vmatpush1.msra.mxu0 0.0
        %308 = vmatprep.subr.mxu0 0.0
        %309 = vmatpush1.msra.mxu0 0.0
        %310 = vmatprep.subr.mxu0 0.0
        %311 = vmatpush1.msra.mxu0 0.0
        %312 = vmatprep.subr.mxu0 0.0
        %313 = vmatpush1.msra.mxu0 0.0
        %314 = vmatprep.subr.mxu0 0.0
        %315 = vmatpush1.msra.mxu0 0.0
        %316 = vmatprep.subr.mxu0 0.0
        %317 = vmatpush1.msra.mxu0 0.0
        %318 = vmatprep.subr.mxu0 0.0
        %319 = vmatpush1.msra.mxu0 0.0
        %320 = vmatprep.subr.mxu0 0.0
        %321 = vmatpush1.msra.mxu0 0.0
        %322 = vmatprep.subr.mxu0 0.0
        %323 = vmatpush1.msra.mxu0 0.0
        %324 = vmatprep.mubr.f32.mxu0 0.0
        %325 = vmatmul.mubr.f32.gmra.mrb[0].mxu0 %v236
        %v326 = vpop.f32.mrb[0].mxu0
        %v327 = vadd.f32 %v258, %v326
        %v328 = vpop.f32.mrb[0].mxu0
        %329 = vdwg.mxu0
        %330 = vst [vmem:[%s232] sm:$0xff] %v327
        %s331 = sand.u32 %s121, 1
        %s332 = scalar_lea.sflag [#allocation4], %s331
        %s333 = sand.u32 %s121, 1
        %s334 = smul.addr %s333, 8
        %s335 = scalar_lea.vmem [#allocation7], %s334
        // Predicated region
        $region41: #{tpu_custom_call.1} parent=31 // pred_check
          %p336 = pneg %p131
        $region42: #{tpu_custom_call.1} parent=31 // pred_check_branch
          %338 = sbr.rel (%p336) target = $region44
        $region43: #{tpu_custom_call.1} parent=31 // pred_region
          %s340 = ssub.s32 128, 128
          %341 = vsyncadd %s332, %s340
          %s342 = sadd.s32 %s26, %s25
          %s343 = smul.addr %s342, 128
          %s344 = scalar_lea.hbm %s3, %s343
          %s346 = sshll.u32 %s335, 4
          %s347 = int_to_ptr.vmem [resolvable:$true] %s346
          %349 = dma.vmem_to_hbm [thread:$0]  %s347, 128, %s344, %s332
        $region44: #{tpu_custom_call.1} parent=31 // pred_fallthru
          _
      $region32: #{tpu_custom_call.1} parent=5 // pred_fallthru
        _
      %p350 = scmp.le.s32.totalorder 2, %s16
      // Predicated region
      $region45: #{tpu_custom_call.1} parent=5 // pred_check
        %p351 = pneg %p350
      $region46: #{tpu_custom_call.1} parent=5 // pred_check_branch
        %353 = sbr.rel (%p351) target = $region48
      $region47: #{tpu_custom_call.1} parent=5 // pred_region
        %s354 = ssub.s32 %s16, 2
        // Predicated region
        $region49: #{tpu_custom_call.1} parent=47 // pred_check
          %p355 = pneg %p137
        $region50: #{tpu_custom_call.1} parent=47 // pred_check_branch
          %357 = sbr.rel (%p355) target = $region52
        $region51: #{tpu_custom_call.1} parent=47 // pred_region
          %s358 = sand.u32 %s122, 1
          %s359 = scalar_lea.sflag [#allocation4], %s358
          %s360 = sand.u32 %s122, 1
          %s361 = smul.addr %s360, 8
          %s362 = scalar_lea.vmem [#allocation7], %s361
          %363 = dma.done %s359, 128
        $region52: #{tpu_custom_call.1} parent=47 // pred_fallthru
          _
      $region48: #{tpu_custom_call.1} parent=5 // pred_fallthru
        _
    $region6: #{tpu_custom_call.1} parent=1 // loop_footer
      %s20 = sadd.s32 1, %s16
    $region7: #{tpu_custom_call.1} parent=1 // loop_footer_branch
      %15 = sbr.rel target = $region3
    $region8: #{tpu_custom_call.1} parent=1 // loop_exit
      _
    %364 = vsyncpa [#allocation3], 1
    %s365 = scalar_lea.sflag [#allocation3], 1
    %366 = vsyncpa %s365, 1
    %367 = vsyncpa [#allocation6], 1
    %368 = vsyncpa [#allocation4], 1
    %s369 = scalar_lea.sflag [#allocation4], 1
    %370 = vsyncpa %s369, 1

</llo_original>
